<compile_context>
chip_gen: v7x
topology: tpu7x:2x2x1
jax: 0.10.0
libtpu: 0.0.40
codegen_flags: <defaults>
</compile_context>

<pallas_src>
import functools
import math

import jax
import jax.numpy as jnp
from jax.experimental import pallas as pl
from jax.experimental.pallas import tpu as pltpu


# ---------------------------------------------------------------------------
# Tiled matmul kernel (used for the q/k/v/o linear projections, no bias)
# ---------------------------------------------------------------------------
def _matmul_kernel(a_ref, b_ref, o_ref, acc_ref):
    @pl.when(pl.program_id(2) == 0)
    def _():
        acc_ref[...] = jnp.zeros_like(acc_ref)

    acc_ref[...] += jnp.dot(a_ref[...], b_ref[...],
                            preferred_element_type=jnp.float32)

    @pl.when(pl.program_id(2) == pl.num_programs(2) - 1)
    def _():
        o_ref[...] = acc_ref[...].astype(o_ref.dtype)


def matmul(a, b, *, tm=256, tn=256, tk=512):
    """[M, K] @ [K, N] -> [M, N]. Falls back to full-extent blocks when a
    dimension is not divisible by the preferred tile (small demo shapes)."""
    M, K = a.shape
    K2, N = b.shape
    assert K == K2
    tm = tm if M % tm == 0 else M
    tn = tn if N % tn == 0 else N
    tk = tk if K % tk == 0 else K
    return pl.pallas_call(
        _matmul_kernel,
        out_shape=jax.ShapeDtypeStruct((M, N), a.dtype),
        grid_spec=pltpu.PrefetchScalarGridSpec(
            num_scalar_prefetch=0,
            grid=(M // tm, N // tn, K // tk),
            in_specs=[pl.BlockSpec((tm, tk), lambda i, j, k: (i, k)),
                      pl.BlockSpec((tk, tn), lambda i, j, k: (k, j))],
            out_specs=pl.BlockSpec((tm, tn), lambda i, j, k: (i, j)),
            scratch_shapes=[pltpu.VMEM((tm, tn), jnp.float32)]),
        compiler_params=pltpu.CompilerParams(
            dimension_semantics=("parallel", "parallel", "arbitrary")),
    )(a, b)


# ---------------------------------------------------------------------------
# Fused RoPE + attention + position-output kernel (one batch element per step)
# ---------------------------------------------------------------------------
def _pe_attn_kernel(q_ref, k_ref, v_ref, selc_ref, sels_ref, posc_ref, poss_ref,
                    mask_ref, attn_ref, pcos_ref, psin_ref, *,
                    num_heads, head_dim, scale):
    hd = head_dim
    sel_cos = selc_ref[0].astype(jnp.float32)    # (S, hd) - RoPE cos (after pos_ids gather)
    sel_sin = sels_ref[0].astype(jnp.float32)    # (S, hd)
    pos_cos = posc_ref[...].astype(jnp.float32)  # (S, hd) - unselected position_states[0]
    pos_sin = poss_ref[...].astype(jnp.float32)  # (S, hd) - unselected position_states[1]
    mask = mask_ref[0, 0].astype(jnp.float32)    # (S, S)

    def rotate_half(x):
        return jnp.concatenate([-x[:, hd // 2:], x[:, :hd // 2]], axis=-1)

    attn_parts, pcos_parts, psin_parts = [], [], []
    for h in range(num_heads):
        lo, hi = h * hd, (h + 1) * hd
        qh = q_ref[0, :, lo:hi].astype(jnp.float32)   # (S, hd), lane-dense input slab
        kh = k_ref[0, :, lo:hi].astype(jnp.float32)
        vh = v_ref[0, :, lo:hi].astype(jnp.float32)

        q_rot = qh * sel_cos + rotate_half(qh) * sel_sin
        k_rot = kh * sel_cos + rotate_half(kh) * sel_sin

        # scores = q_rot @ k_rot^T / sqrt(hd) + mask
        s = jax.lax.dot_general(q_rot, k_rot, (((1,), (1,)), ((), ())),
                                preferred_element_type=jnp.float32) * scale
        s = s + mask

        # softmax in f32 (matches torch: softmax(dtype=f32) then cast)
        m = jnp.max(s, axis=-1, keepdims=True)
        e = jnp.exp(s - m)
        p = e / jnp.sum(e, axis=-1, keepdims=True)

        attn_parts.append(jnp.dot(p, vh, preferred_element_type=jnp.float32))
        pcos_parts.append(jnp.dot(p, pos_cos, preferred_element_type=jnp.float32))
        psin_parts.append(jnp.dot(p, pos_sin, preferred_element_type=jnp.float32))

    # Lane-dense [S, num_heads*hd] stores (this IS transpose(1,2).reshape(...) of
    # the [B, nH, S, hd] layout, done for free at store time).
    attn_ref[0] = jnp.concatenate(attn_parts, axis=-1).astype(attn_ref.dtype)
    pcos_ref[0] = jnp.concatenate(pcos_parts, axis=-1).astype(pcos_ref.dtype)
    psin_ref[0] = jnp.concatenate(psin_parts, axis=-1).astype(psin_ref.dtype)


# ---------------------------------------------------------------------------
# dot_product = cos @ cos^T + sin @ sin^T
# ---------------------------------------------------------------------------
def _posdot_kernel(cos_ref, sin_ref, out_ref):
    c = cos_ref[0].astype(jnp.float32)
    s = sin_ref[0].astype(jnp.float32)
    cc = jax.lax.dot_general(c, c, (((1,), (1,)), ((), ())),
                             preferred_element_type=jnp.float32)
    ss = jax.lax.dot_general(s, s, (((1,), (1,)), ((), ())),
                             preferred_element_type=jnp.float32)
    out_ref[0] = (cc + ss).astype(out_ref.dtype)


def position_inner_product(cos, sin):
    lead = cos.shape[:-2]
    S, hd = cos.shape[-2:]
    L = 1
    for d in lead:
        L *= d
    cos3 = cos.reshape(L, S, hd)
    sin3 = sin.reshape(L, S, hd)
    out = pl.pallas_call(
        _posdot_kernel,
        out_shape=jax.ShapeDtypeStruct((L, S, S), cos.dtype),
        grid_spec=pltpu.PrefetchScalarGridSpec(
            num_scalar_prefetch=0,
            grid=(L,),
            in_specs=[pl.BlockSpec((1, S, hd), lambda i: (i, 0, 0)),
                      pl.BlockSpec((1, S, hd), lambda i: (i, 0, 0))],
            out_specs=pl.BlockSpec((1, S, S), lambda i: (i, 0, 0))),
        compiler_params=pltpu.CompilerParams(dimension_semantics=("parallel",)),
    )(cos3, sin3)
    return out.reshape(*lead, S, S)


# ---------------------------------------------------------------------------
# position_ids handling (glue; mirrors the torch apply_rotary_pos_emb branching)
# ---------------------------------------------------------------------------
def _select_pos(cos, sin, position_ids):
    if position_ids is None:
        return cos, sin
    if position_ids.shape[0] == 1:
        if position_ids.shape[1] == 1:
            return cos, sin
        sel = position_ids[0]
        return cos[:, :, sel, :], sin[:, :, sel, :]
    gather = jax.vmap(lambda c, ids: c[:, ids, :])
    return gather(cos, position_ids), gather(sin, position_ids)


# ---------------------------------------------------------------------------
# Full module forward
# ---------------------------------------------------------------------------
def pe_llama_attention_forward(hidden_states, position_states, attention_mask,
                               position_ids, *, wq, wk, wv, wo,
                               num_heads, num_kv_heads):
    B, S, H = hidden_states.shape
    hd = H // num_heads
    assert num_heads // num_kv_heads == 1, \
        "kernel assumes num_key_value_groups == 1 (same assert as the torch module)"

    # q/k/v projections (Pallas matmul); keep the lane-dense [B, S, H] layout —
    # the per-head split happens as free lane slicing inside the fused kernel.
    x2d = hidden_states.reshape(B * S, H)
    q = matmul(x2d, wq.T).reshape(B, S, num_heads * hd)
    k = matmul(x2d, wk.T).reshape(B, S, num_kv_heads * hd)
    v = matmul(x2d, wv.T).reshape(B, S, num_kv_heads * hd)

    cos, sin = position_states
    # dot_product uses the UNselected position_states (as in the torch code).
    dot_product = position_inner_product(cos, sin)

    # position_ids gather for RoPE (glue)
    sel_cos, sel_sin = _select_pos(cos, sin, position_ids)
    # TODO(synk): per-head position_states (head dim > 1 with distinct values per
    # head) is not supported by the fused kernel; standard caches are [1,1,S,hd].
    sel_cos_b = jnp.broadcast_to(sel_cos, (B,) + sel_cos.shape[1:])[:, 0]  # (B, S, hd)
    sel_sin_b = jnp.broadcast_to(sel_sin, (B,) + sel_sin.shape[1:])[:, 0]
    pos_cos2d = cos.reshape(-1, S, hd)[0]  # (S, hd)
    pos_sin2d = sin.reshape(-1, S, hd)[0]

    if attention_mask is None:
        mask = jnp.zeros((B, 1, S, S), dtype=hidden_states.dtype)
    else:
        mask = attention_mask

    kernel = functools.partial(_pe_attn_kernel, num_heads=num_heads,
                               head_dim=hd, scale=1.0 / math.sqrt(hd))
    attn_packed, pcos_packed, psin_packed = pl.pallas_call(
        kernel,
        out_shape=(
            jax.ShapeDtypeStruct((B, S, num_heads * hd), hidden_states.dtype),
            jax.ShapeDtypeStruct((B, S, num_heads * hd), cos.dtype),
            jax.ShapeDtypeStruct((B, S, num_heads * hd), sin.dtype),
        ),
        grid_spec=pltpu.PrefetchScalarGridSpec(
            num_scalar_prefetch=0,
            grid=(B,),
            in_specs=[
                pl.BlockSpec((1, S, num_heads * hd), lambda b: (b, 0, 0)),     # q
                pl.BlockSpec((1, S, num_kv_heads * hd), lambda b: (b, 0, 0)),  # k
                pl.BlockSpec((1, S, num_kv_heads * hd), lambda b: (b, 0, 0)),  # v
                pl.BlockSpec((1, S, hd), lambda b: (b, 0, 0)),                 # sel_cos
                pl.BlockSpec((1, S, hd), lambda b: (b, 0, 0)),                 # sel_sin
                pl.BlockSpec((S, hd), lambda b: (0, 0)),                       # pos_cos
                pl.BlockSpec((S, hd), lambda b: (0, 0)),                       # pos_sin
                pl.BlockSpec((1, 1, S, S), lambda b: (b, 0, 0, 0)),            # mask
            ],
            out_specs=(
                pl.BlockSpec((1, S, num_heads * hd), lambda b: (b, 0, 0)),
                pl.BlockSpec((1, S, num_heads * hd), lambda b: (b, 0, 0)),
                pl.BlockSpec((1, S, num_heads * hd), lambda b: (b, 0, 0)),
            )),
        compiler_params=pltpu.CompilerParams(dimension_semantics=("parallel",)),
    )(q, k, v, sel_cos_b, sel_sin_b, pos_cos2d, pos_sin2d, mask)

    # attn_packed already is transpose(1,2).reshape(B, S, hidden) -> straight to o_proj
    attn_output = matmul(attn_packed.reshape(B * S, H), wo.T).reshape(B, S, H)

    pos_output = (
        pcos_packed.reshape(B, S, num_heads, hd).transpose(0, 2, 1, 3),
        psin_packed.reshape(B, S, num_heads, hd).transpose(0, 2, 1, 3),
    )
    # TODO(synk): use_cache / past_key_value concatenation and pretraining_tp > 1
    # weight slicing are not implemented (module's default inference path only).
    return attn_output, pos_output, dot_product, None


# ---------------------------------------------------------------------------
# Pure-JAX reference (mirrors the torch module)
# ---------------------------------------------------------------------------
def _reference_forward(hidden_states, position_states, attention_mask, position_ids,
                       wq, wk, wv, wo, num_heads, num_kv_heads):
    B, S, H = hidden_states.shape
    hd = H // num_heads
    q = hidden_states @ wq.T
    k = hidden_states @ wk.T
    v = hidden_states @ wv.T
    q = q.reshape(B, S, num_heads, hd).transpose(0, 2, 1, 3)
    k = k.reshape(B, S, num_kv_heads, hd).transpose(0, 2, 1, 3)
    v = v.reshape(B, S, num_kv_heads, hd).transpose(0, 2, 1, 3)

    cos, sin = position_states
    sel_cos, sel_sin = _select_pos(cos, sin, position_ids)

    def rot_half(x):
        return jnp.concatenate([-x[..., hd // 2:], x[..., :hd // 2]], axis=-1)

    q_emb = q * sel_cos + rot_half(q) * sel_sin
    k_emb = k * sel_cos + rot_half(k) * sel_sin

    dot_product = (cos @ jnp.swapaxes(cos, -2, -1) +
                   sin @ jnp.swapaxes(sin, -2, -1))

    attn = (q_emb @ jnp.swapaxes(k_emb, -2, -1)) / math.sqrt(hd)
    if attention_mask is not None:
        attn = attn + attention_mask
    probs = jax.nn.softmax(attn.astype(jnp.float32), axis=-1).astype(q.dtype)
    attn_out = probs @ v
    pos_out = (probs @ cos, probs @ sin)
    attn_out = attn_out.transpose(0, 2, 1, 3).reshape(B, S, H)
    attn_out = attn_out @ wo.T
    return attn_out, pos_out, dot_product, None


if __name__ == "__main__":
    key = jax.random.PRNGKey(0)
    B, S, H = 2, 16, 128
    num_heads, num_kv_heads = 4, 4
    hd = H // num_heads

    k0, k1, k2, k3, k4 = jax.random.split(key, 5)
    scale_w = 1.0 / math.sqrt(H)
    hidden_states = jax.random.normal(k0, (B, S, H), dtype=jnp.float32)
    wq = jax.random.normal(k1, (H, H), dtype=jnp.float32) * scale_w
    wk = jax.random.normal(k2, (H, H), dtype=jnp.float32) * scale_w
    wv = jax.random.normal(k3, (H, H), dtype=jnp.float32) * scale_w
    wo = jax.random.normal(k4, (H, H), dtype=jnp.float32) * scale_w

    # Standard rotary cache as position_states: [1, 1, S, hd]
    base = 10000.0
    inv_freq = 1.0 / (base ** (jnp.arange(0, hd, 2, dtype=jnp.float32) / hd))
    t = jnp.arange(S, dtype=jnp.float32)
    freqs = jnp.einsum("i,j->ij", t, inv_freq)
    emb = jnp.concatenate([freqs, freqs], axis=-1)
    cos = jnp.cos(emb)[None, None].astype(jnp.float32)
    sin = jnp.sin(emb)[None, None].astype(jnp.float32)
    position_states = (cos, sin)

    position_ids = jnp.arange(S, dtype=jnp.int32)[None]  # (1, S)
    causal = jnp.tril(jnp.ones((S, S), dtype=bool))
    attention_mask = jnp.broadcast_to(
        jnp.where(causal, 0.0, -1e9).astype(jnp.float32)[None, None], (B, 1, S, S))

    attn_out, pos_out, dot_product, pkv = pe_llama_attention_forward(
        hidden_states, position_states, attention_mask, position_ids,
        wq=wq, wk=wk, wv=wv, wo=wo, num_heads=num_heads, num_kv_heads=num_kv_heads)
    jax.block_until_ready((attn_out, pos_out, dot_product))

    ref_attn, ref_pos, ref_dot, _ = _reference_forward(
        hidden_states, position_states, attention_mask, position_ids,
        wq, wk, wv, wo, num_heads, num_kv_heads)

    assert attn_out.shape == (B, S, H)
    assert pos_out[0].shape == (B, num_heads, S, hd)
    assert pos_out[1].shape == (B, num_heads, S, hd)
    assert dot_product.shape == (1, 1, S, S)
    assert jnp.allclose(attn_out, ref_attn, atol=2e-3, rtol=2e-3)
    assert jnp.allclose(pos_out[0], ref_pos[0], atol=2e-3, rtol=2e-3)
    assert jnp.allclose(pos_out[1], ref_pos[1], atol=2e-3, rtol=2e-3)
    assert jnp.allclose(dot_product, ref_dot, atol=2e-3, rtol=2e-3)

    print("KERNEL_OK")
</pallas_src>

<mosaic_0001>
module attributes {stable_mosaic.version = 11 : i64} {
  func.func @_matmul_kernel(%arg0: i32, %arg1: i32, %arg2: i32, %arg3: memref<32x128xf32, #tpu.memory_space<vmem>>, %arg4: memref<128x128xf32, #tpu.memory_space<vmem>>, %arg5: memref<32x128xf32, #tpu.memory_space<vmem>>, %arg6: memref<32x128xf32, #tpu.memory_space<vmem>>) attributes {dimension_semantics = [#tpu.dimension_semantics<parallel>, #tpu.dimension_semantics<parallel>, #tpu.dimension_semantics<arbitrary>], iteration_bounds = array<i64: 1, 1, 1>, scalar_prefetch = 0 : i64, scratch_operands = 1 : i64, tpu.core_type = #tpu.core_type<tc>, window_params = [{transform_indices = @transform_0, window_bounds = array<i64: 32, 128>}, {transform_indices = @transform_1, window_bounds = array<i64: 128, 128>}, {transform_indices = @transform_2, window_bounds = array<i64: 32, 128>}]} {
    %c0_i32 = arith.constant 0 : i32
    %0 = arith.cmpi eq, %arg2, %c0_i32 : i32
    %1 = arith.extui %0 : i1 to i32
    %c0_i32_0 = arith.constant 0 : i32
    %2 = arith.cmpi ne, %1, %c0_i32_0 : i32
    scf.if %2 {
      %cst_10 = arith.constant 0.000000e+00 : f32
      %12 = vector.broadcast %cst_10 : f32 to vector<32x128xf32>
      %c0_11 = arith.constant 0 : index
      %c0_12 = arith.constant 0 : index
      %13 = vector.load %arg6[%c0_11, %c0_12] : memref<32x128xf32, #tpu.memory_space<vmem>>, vector<32x128xf32>
      tpu.vector_store %arg6[%c0_11, %c0_12], %12 {strides = array<i32>} : memref<32x128xf32, #tpu.memory_space<vmem>>, vector<32x128xf32>,
    } else {
    }
    %c0 = arith.constant 0 : index
    %c0_1 = arith.constant 0 : index
    %3 = vector.load %arg6[%c0, %c0_1] : memref<32x128xf32, #tpu.memory_space<vmem>>, vector<32x128xf32>
    %c0_2 = arith.constant 0 : index
    %c0_3 = arith.constant 0 : index
    %4 = vector.load %arg3[%c0_2, %c0_3] : memref<32x128xf32, #tpu.memory_space<vmem>>, vector<32x128xf32>
    %c0_4 = arith.constant 0 : index
    %c0_5 = arith.constant 0 : index
    %5 = vector.load %arg4[%c0_4, %c0_5] : memref<128x128xf32, #tpu.memory_space<vmem>>, vector<128x128xf32>
    %cst = arith.constant dense<0.000000e+00> : vector<32x128xf32>
    %6 = tpu.matmul %4, %5, %cst {dimension_numbers = #tpu.dot_dimension_numbers<[1], [0], [0], [1], [0, 0, 1, 1], [], []>} : vector<32x128xf32>, vector<128x128xf32>, vector<32x128xf32> -> vector<32x128xf32>
    %7 = arith.addf %3, %6 : vector<32x128xf32>
    %c0_6 = arith.constant 0 : index
    %c0_7 = arith.constant 0 : index
    %8 = vector.load %arg6[%c0_6, %c0_7] : memref<32x128xf32, #tpu.memory_space<vmem>>, vector<32x128xf32>
    tpu.vector_store %arg6[%c0_6, %c0_7], %7 {strides = array<i32>} : memref<32x128xf32, #tpu.memory_space<vmem>>, vector<32x128xf32>,
    %c0_i32_8 = arith.constant 0 : i32
    %9 = arith.cmpi eq, %arg2, %c0_i32_8 : i32
    %10 = arith.extui %9 : i1 to i32
    %c0_i32_9 = arith.constant 0 : i32
    %11 = arith.cmpi ne, %10, %c0_i32_9 : i32
    scf.if %11 {
      %c0_10 = arith.constant 0 : index
      %c0_11 = arith.constant 0 : index
      %12 = vector.load %arg6[%c0_10, %c0_11] : memref<32x128xf32, #tpu.memory_space<vmem>>, vector<32x128xf32>
      %c0_12 = arith.constant 0 : index
      %c0_13 = arith.constant 0 : index
      %13 = vector.load %arg5[%c0_12, %c0_13] : memref<32x128xf32, #tpu.memory_space<vmem>>, vector<32x128xf32>
      tpu.vector_store %arg5[%c0_12, %c0_13], %12 {strides = array<i32>} : memref<32x128xf32, #tpu.memory_space<vmem>>, vector<32x128xf32>,
    } else {
    }
    return
  }
  func.func @transform_0(%arg0: i32, %arg1: i32, %arg2: i32) -> (i32, i32) {
    %c0_i32 = arith.constant 0 : i32
    return %arg0, %arg2 : i32, i32
  }
  func.func @transform_1(%arg0: i32, %arg1: i32, %arg2: i32) -> (i32, i32) {
    %c0_i32 = arith.constant 0 : i32
    return %arg2, %arg1 : i32, i32
  }
  func.func @transform_2(%arg0: i32, %arg1: i32, %arg2: i32) -> (i32, i32) {
    %c0_i32 = arith.constant 0 : i32
    return %arg0, %arg1 : i32, i32
  }
}

</mosaic_0001>

<llo_original>
// kernel: tpu_custom_call.1
$region0: #{tpu_custom_call.1}
  #allocation0 [shape = 'u32[]', space=smem, size = 0x4, offset = 0x4, fixed_abs, tag = 'smem constant byte address 0x4 - core index']
  #allocation1 [shape = 'u32[144,128]{1,0:T(1,128)}', space=vmem, size = 0x12000, scoped, tag = 'internal scratch']
  #allocation2 [shape = 'f32[32,128]{1,0:T(8,128)}', space=vmem, size = 0x4000, scoped, tag = 'scratch operand']
  %s0 = inlined_call_operand.hbm [shape: f32[32,128], index: 0, kind: input, shape index: {}]
  %s1 = inlined_call_operand.hbm [shape: f32[128,128], index: 1, kind: input, shape index: {}]
  %s2 = inlined_call_operand.hbm [shape: f32[32,128], index: 2, kind: output, shape index: {}]
  %s3 = sld [smem:[#allocation0]]
  $region34: #{tpu_custom_call.1} parent=0
    _
  %s5 = ssub.s32 1, %s3
  %s6 = scalar_select 0, %s5, %s3
  $region1: #{tpu_custom_call.1} parent=0
    #allocation3 [shape = 'u8[16384]{0}', space=vmem, size = 0x4000, scoped, tag = 'input window, operand 0, single buffered']
    #allocation4 [shape = 's32[1]{0}', space=sflag, size = 0x4, scoped, tag = 'scoped memory for tpu_custom_call.1']
    #allocation5 [shape = 's32[1]{0}', space=sflag, size = 0x4, scoped, tag = 'scoped memory for tpu_custom_call.1']
    #allocation6 [shape = 'u8[65536]{0}', space=vmem, size = 0x10000, scoped, tag = 'input window, operand 1, single buffered']
    #allocation7 [shape = 's32[1]{0}', space=sflag, size = 0x4, scoped, tag = 'scoped memory for tpu_custom_call.1']
    #allocation8 [shape = 'u8[16384]{0}', space=vmem, size = 0x4000, scoped, tag = 'output window, operand 0, single buffered']
    %7 = vsyncpa [#allocation4], 0
    %8 = vsyncpa [#allocation7], 0
    %9 = vsyncpa [#allocation5], 0
    // Predicated region
    $region2: #{tpu_custom_call.1} parent=1 // pred_check
      _
    $region3: #{tpu_custom_call.1} parent=1 // pred_check_branch
      %11 = sbr.rel (0) target = $region5
    $region4: #{tpu_custom_call.1} parent=1 // pred_region
      %s13 = ssub.s32 512, 512
      %14 = vsyncadd [#allocation4], %s13
      %s15 = sshll.u32 [#allocation3], 4
      %s16 = int_to_ptr.vmem [resolvable:$true] %s15
      %21 = dma.hbm_to_vmem [thread:$0]  %s0, 512, %s16, [#allocation4], 128, 128, 8
    $region5: #{tpu_custom_call.1} parent=1 // pred_fallthru
      _
    // Predicated region
    $region6: #{tpu_custom_call.1} parent=1 // pred_check
      _
    $region7: #{tpu_custom_call.1} parent=1 // pred_check_branch
      %23 = sbr.rel (0) target = $region9
    $region8: #{tpu_custom_call.1} parent=1 // pred_region
      %s25 = ssub.s32 2048, 2048
      %26 = vsyncadd [#allocation7], %s25
      %s27 = sshll.u32 [#allocation6], 4
      %s28 = int_to_ptr.vmem [resolvable:$true] %s27
      %33 = dma.hbm_to_vmem [thread:$0]  %s1, 2048, %s28, [#allocation7], 128, 128, 8
    $region9: #{tpu_custom_call.1} parent=1 // pred_fallthru
      _
    // Predicated region
    $region10: #{tpu_custom_call.1} parent=1 // pred_check
      _
    $region11: #{tpu_custom_call.1} parent=1 // pred_check_branch
      %35 = sbr.rel (0) target = $region13
    $region12: #{tpu_custom_call.1} parent=1 // pred_region
      %36 = dma.done [#allocation4], 512
    $region13: #{tpu_custom_call.1} parent=1 // pred_fallthru
      _
    // Predicated region
    $region14: #{tpu_custom_call.1} parent=1 // pred_check
      _
    $region15: #{tpu_custom_call.1} parent=1 // pred_check_branch
      %38 = sbr.rel (0) target = $region17
    $region16: #{tpu_custom_call.1} parent=1 // pred_region
      %39 = dma.done [#allocation7], 2048
    $region17: #{tpu_custom_call.1} parent=1 // pred_fallthru
      _
    %p40 = scmp.eq.s32.totalorder 0, 0
    // Predicated region
    $region18: #{tpu_custom_call.1} parent=1 // pred_check
      %p41 = pneg %p40
    $region19: #{tpu_custom_call.1} parent=1 // pred_check_branch
      %43 = sbr.rel (%p41) target = $region21
    $region20: #{tpu_custom_call.1} parent=1 // pred_region
      %44 = vst [vmem:[#allocation2] sm:$0xff] 0.0
      %45 = vst [vmem:[#allocation2 + $0x8] sm:$0xff] 0.0
      %46 = vst [vmem:[#allocation2 + $0x10] sm:$0xff] 0.0
      %47 = vst [vmem:[#allocation2 + $0x18] sm:$0xff] 0.0
    $region21: #{tpu_custom_call.1} parent=1 // pred_fallthru
      _
    %v48 = vld [vmem:[#allocation2] sm:$0xff]
    %v49 = vld [vmem:[#allocation2 + $0x8] sm:$0xff]
    %v50 = vld [vmem:[#allocation2 + $0x10] sm:$0xff]
    %v51 = vld [vmem:[#allocation2 + $0x18] sm:$0xff]
    %v52 = vld [vmem:[#allocation3] sm:$0xff]
    %v53 = vld [vmem:[#allocation3 + $0x8] sm:$0xff]
    %v54 = vld [vmem:[#allocation3 + $0x10] sm:$0xff]
    %v55 = vld [vmem:[#allocation3 + $0x18] sm:$0xff]
    %v56 = vld [vmem:[#allocation6] sm:$0xff]
    %v57 = vld [vmem:[#allocation6 + $0x8] sm:$0xff]
    %v58 = vld [vmem:[#allocation6 + $0x10] sm:$0xff]
    %v59 = vld [vmem:[#allocation6 + $0x18] sm:$0xff]
    %v60 = vld [vmem:[#allocation6 + $0x20] sm:$0xff]
    %v61 = vld [vmem:[#allocation6 + $0x28] sm:$0xff]
    %v62 = vld [vmem:[#allocation6 + $0x30] sm:$0xff]
    %v63 = vld [vmem:[#allocation6 + $0x38] sm:$0xff]
    %v64 = vld [vmem:[#allocation6 + $0x40] sm:$0xff]
    %v65 = vld [vmem:[#allocation6 + $0x48] sm:$0xff]
    %v66 = vld [vmem:[#allocation6 + $0x50] sm:$0xff]
    %v67 = vld [vmem:[#allocation6 + $0x58] sm:$0xff]
    %v68 = vld [vmem:[#allocation6 + $0x60] sm:$0xff]
    %v69 = vld [vmem:[#allocation6 + $0x68] sm:$0xff]
    %v70 = vld [vmem:[#allocation6 + $0x70] sm:$0xff]
    %v71 = vld [vmem:[#allocation6 + $0x78] sm:$0xff]
    %72 = vmatprep.subr.mxu0 0.0
    %73 = vmatpush1.msra.mxu0 %v56
    %74 = vmatprep.subr.mxu0 0.0
    %75 = vmatpush1.msra.mxu0 %v57
    %76 = vmatprep.subr.mxu0 0.0
    %77 = vmatpush1.msra.mxu0 %v58
    %78 = vmatprep.subr.mxu0 0.0
    %79 = vmatpush1.msra.mxu0 %v59
    %80 = vmatprep.subr.mxu0 0.0
    %81 = vmatpush1.msra.mxu0 %v60
    %82 = vmatprep.subr.mxu0 0.0
    %83 = vmatpush1.msra.mxu0 %v61
    %84 = vmatprep.subr.mxu0 0.0
    %85 = vmatpush1.msra.mxu0 %v62
    %86 = vmatprep.subr.mxu0 0.0
    %87 = vmatpush1.msra.mxu0 %v63
    %88 = vmatprep.subr.mxu0 0.0
    %89 = vmatpush1.msra.mxu0 %v64
    %90 = vmatprep.subr.mxu0 0.0
    %91 = vmatpush1.msra.mxu0 %v65
    %92 = vmatprep.subr.mxu0 0.0
    %93 = vmatpush1.msra.mxu0 %v66
    %94 = vmatprep.subr.mxu0 0.0
    %95 = vmatpush1.msra.mxu0 %v67
    %96 = vmatprep.subr.mxu0 0.0
    %97 = vmatpush1.msra.mxu0 %v68
    %98 = vmatprep.subr.mxu0 0.0
    %99 = vmatpush1.msra.mxu0 %v69
    %100 = vmatprep.subr.mxu0 0.0
    %101 = vmatpush1.msra.mxu0 %v70
    %102 = vmatprep.subr.mxu0 0.0
    %103 = vmatpush1.msra.mxu0 %v71
    %104 = vmatprep.subr.mxu0 0.0
    %105 = vmatpush1.msra.mxu0 0.0
    %106 = vmatprep.subr.mxu0 0.0
    %107 = vmatpush1.msra.mxu0 0.0
    %108 = vmatprep.subr.mxu0 0.0
    %109 = vmatpush1.msra.mxu0 0.0
    %110 = vmatprep.subr.mxu0 0.0
    %111 = vmatpush1.msra.mxu0 0.0
    %112 = vmatprep.subr.mxu0 0.0
    %113 = vmatpush1.msra.mxu0 0.0
    %114 = vmatprep.subr.mxu0 0.0
    %115 = vmatpush1.msra.mxu0 0.0
    %116 = vmatprep.subr.mxu0 0.0
    %117 = vmatpush1.msra.mxu0 0.0
    %118 = vmatprep.subr.mxu0 0.0
    %119 = vmatpush1.msra.mxu0 0.0
    %120 = vmatprep.subr.mxu0 0.0
    %121 = vmatpush1.msra.mxu0 0.0
    %122 = vmatprep.subr.mxu0 0.0
    %123 = vmatpush1.msra.mxu0 0.0
    %124 = vmatprep.subr.mxu0 0.0
    %125 = vmatpush1.msra.mxu0 0.0
    %126 = vmatprep.subr.mxu0 0.0
    %127 = vmatpush1.msra.mxu0 0.0
    %128 = vmatprep.subr.mxu0 0.0
    %129 = vmatpush1.msra.mxu0 0.0
    %130 = vmatprep.subr.mxu0 0.0
    %131 = vmatpush1.msra.mxu0 0.0
    %132 = vmatprep.subr.mxu0 0.0
    %133 = vmatpush1.msra.mxu0 0.0
    %134 = vmatprep.subr.mxu0 0.0
    %135 = vmatpush1.msra.mxu0 0.0
    %136 = vmatprep.mubr.f32.mxu0 0.0
    %137 = vmatmul.mubr.f32.gmra.mrb[0].mxu0 %v52
    %v138 = vpop.f32.mrb[0].mxu0
    %v139 = vadd.f32 0.0, %v138
    %v140 = vpop.f32.mrb[0].mxu0
    %141 = vmatprep.mubr.f32.mxu0 0.0
    %142 = vmatmul.mubr.f32.gmra.mrb[0].mxu0 %v53
    %v143 = vpop.f32.mrb[0].mxu0
    %v144 = vadd.f32 0.0, %v143
    %v145 = vpop.f32.mrb[0].mxu0
    %146 = vmatprep.mubr.f32.mxu0 0.0
    %147 = vmatmul.mubr.f32.gmra.mrb[0].mxu0 %v54
    %v148 = vpop.f32.mrb[0].mxu0
    %v149 = vadd.f32 0.0, %v148
    %v150 = vpop.f32.mrb[0].mxu0
    %151 = vmatprep.mubr.f32.mxu0 0.0
    %152 = vmatmul.mubr.f32.gmra.mrb[0].mxu0 %v55
    %v153 = vpop.f32.mrb[0].mxu0
    %v154 = vadd.f32 0.0, %v153
    %v155 = vpop.f32.mrb[0].mxu0
    %156 = vdwg.mxu0
    %v157 = vadd.f32 %v48, %v139
    %v158 = vadd.f32 %v49, %v144
    %v159 = vadd.f32 %v50, %v149
    %v160 = vadd.f32 %v51, %v154
    %161 = vst [vmem:[#allocation2] sm:$0xff] %v157
    %162 = vst [vmem:[#allocation2 + $0x8] sm:$0xff] %v158
    %163 = vst [vmem:[#allocation2 + $0x10] sm:$0xff] %v159
    %164 = vst [vmem:[#allocation2 + $0x18] sm:$0xff] %v160
    // Predicated region
    $region22: #{tpu_custom_call.1} parent=1 // pred_check
      %p165 = pneg %p40
    $region23: #{tpu_custom_call.1} parent=1 // pred_check_branch
      %167 = sbr.rel (%p165) target = $region25
    $region24: #{tpu_custom_call.1} parent=1 // pred_region
      %v168 = vld [vmem:[#allocation2] sm:$0xff]
      %v169 = vld [vmem:[#allocation2 + $0x8] sm:$0xff]
      %v170 = vld [vmem:[#allocation2 + $0x10] sm:$0xff]
      %v171 = vld [vmem:[#allocation2 + $0x18] sm:$0xff]
      %172 = vst [vmem:[#allocation8] sm:$0xff] %v168
      %173 = vst [vmem:[#allocation8 + $0x8] sm:$0xff] %v169
      %174 = vst [vmem:[#allocation8 + $0x10] sm:$0xff] %v170
      %175 = vst [vmem:[#allocation8 + $0x18] sm:$0xff] %v171
    $region25: #{tpu_custom_call.1} parent=1 // pred_fallthru
      _
    // Predicated region
    $region26: #{tpu_custom_call.1} parent=1 // pred_check
      _
    $region27: #{tpu_custom_call.1} parent=1 // pred_check_branch
      %177 = sbr.rel (0) target = $region29
    $region28: #{tpu_custom_call.1} parent=1 // pred_region
      %s179 = ssub.s32 512, 512
      %180 = vsyncadd [#allocation5], %s179
      %s181 = sshll.u32 [#allocation8], 4
      %s182 = int_to_ptr.vmem [resolvable:$true] %s181
      %187 = dma.vmem_to_hbm [thread:$0]  %s182, 512, %s2, [#allocation5], 128, 128, 8
    $region29: #{tpu_custom_call.1} parent=1 // pred_fallthru
      _
    // Predicated region
    $region30: #{tpu_custom_call.1} parent=1 // pred_check
      _
    $region31: #{tpu_custom_call.1} parent=1 // pred_check_branch
      %189 = sbr.rel (0) target = $region33
    $region32: #{tpu_custom_call.1} parent=1 // pred_region
      %190 = dma.done [#allocation5], 512
    $region33: #{tpu_custom_call.1} parent=1 // pred_fallthru
      _
    %191 = vsyncpa [#allocation4], 1
    %192 = vsyncpa [#allocation7], 1
    %193 = vsyncpa [#allocation5], 1

</llo_original>
